<compile_context>
chip_gen: v7x
topology: tpu7x:2x2x1
jax: 0.10.0
libtpu: 0.0.40
codegen_flags: <defaults>
</compile_context>

<pallas_src>
import jax
import jax.numpy as jnp
from jax.experimental import pallas as pl
from jax.experimental.pallas import tpu as pltpu

D_OUT_PAD = 8  # padded quantile-output width (block last dim == full array dim)


def _round_up(n, m):
    return ((n + m - 1) // m) * m


def quantnn_kernel(x_ref, w1_ref, b1_ref, w2_ref, b2_ref, wo_ref, bo_ref, out_ref):
    # Hidden layer 1: Linear (bf16 MXU inputs, f32 accumulate) + bias + ReLU in f32
    x = x_ref[...].astype(jnp.bfloat16)
    h = jnp.dot(x, w1_ref[...], preferred_element_type=jnp.float32) + b1_ref[...]
    h = jnp.maximum(h, 0.0)
    # Hidden layer 2
    h = jnp.dot(h.astype(jnp.bfloat16), w2_ref[...],
                preferred_element_type=jnp.float32) + b2_ref[...]
    h = jnp.maximum(h, 0.0)
    # TODO(synk): nn.Dropout is identity in eval mode; omitted.
    # Output layer: Linear to (narrowly) padded quantile outputs
    o = jnp.dot(h.astype(jnp.bfloat16), wo_ref[...],
                preferred_element_type=jnp.float32) + bo_ref[...]
    out_ref[...] = o.astype(out_ref.dtype)


def prepare_params(w1, b1, w2, b2, wo, bo):
    """One-time parameter prep (call once, reuse across forwards).

    w*: (in, out) arrays (already transposed relative to PyTorch's (out, in)).
    Returns bf16 weights, f32 biases, and the output layer zero-padded to
    D_OUT_PAD lanes (padding columns exactly zero).
    """
    H2, d_out = wo.shape
    wo_p = jnp.zeros((H2, D_OUT_PAD), jnp.bfloat16).at[:, :d_out].set(
        wo.astype(jnp.bfloat16))
    bo_p = jnp.zeros((1, D_OUT_PAD), jnp.float32).at[:, :d_out].set(
        bo.astype(jnp.float32))
    return (w1.astype(jnp.bfloat16), b1.astype(jnp.float32),
            w2.astype(jnp.bfloat16), b2.astype(jnp.float32),
            wo_p, bo_p, d_out)


def quantnn_forward(x, params, *, batch_tile=1024):
    """x: (B, D_in) f32. params: output of prepare_params().

    Returns (B, D_out) f32 quantile predictions.
    """
    w1, b1, w2, b2, wo_p, bo_p, d_out = params
    B, D_in = x.shape
    H1 = w1.shape[1]
    H2 = w2.shape[1]

    # Tile selection:
    #  - whole batch in one tile when it fits (no forced multi-step grid on
    #    single-TensorCore v5e/v6e),
    #  - otherwise balanced steps of ~batch_tile rows, nudged to an even step
    #    count so v7x's two TensorCores split the "parallel" axis evenly,
    #  - tiles are always multiples of 8 (sublane); the last block may be
    #    partial - Pallas clips the writeback and rows are independent.
    if B <= batch_tile:
        tile = _round_up(B, 8)
    else:
        n_steps = pl.cdiv(B, batch_tile)
        if n_steps % 2 == 1 and B >= 2 * 256:
            n_steps += 1
        tile = _round_up(pl.cdiv(B, n_steps), 8)
    grid = (pl.cdiv(B, tile),)

    flops = 2 * B * (D_in * H1 + H1 * H2 + H2 * D_OUT_PAD)
    bytes_accessed = (B * (D_in + D_OUT_PAD) * 4
                      + 2 * (D_in * H1 + H1 * H2 + H2 * D_OUT_PAD)
                      + 4 * (H1 + H2 + D_OUT_PAD))

    out_padded = pl.pallas_call(
        quantnn_kernel,
        out_shape=jax.ShapeDtypeStruct((B, D_OUT_PAD), jnp.float32),
        grid_spec=pltpu.PrefetchScalarGridSpec(
            num_scalar_prefetch=0,
            grid=grid,
            in_specs=[
                pl.BlockSpec((tile, D_in), lambda i: (i, 0)),       # x tile
                pl.BlockSpec((D_in, H1), lambda i: (0, 0)),         # W1^T (resident)
                pl.BlockSpec((1, H1), lambda i: (0, 0)),            # b1
                pl.BlockSpec((H1, H2), lambda i: (0, 0)),           # W2^T (resident)
                pl.BlockSpec((1, H2), lambda i: (0, 0)),            # b2
                pl.BlockSpec((H2, D_OUT_PAD), lambda i: (0, 0)),    # Wout^T padded
                pl.BlockSpec((1, D_OUT_PAD), lambda i: (0, 0)),     # bout padded
            ],
            out_specs=pl.BlockSpec((tile, D_OUT_PAD), lambda i: (i, 0)),
        ),
        compiler_params=pltpu.CompilerParams(
            dimension_semantics=("parallel",),
            vmem_limit_bytes=32 * 1024 * 1024,
        ),
        cost_estimate=pl.CostEstimate(
            flops=flops, transcendentals=0, bytes_accessed=bytes_accessed),
    )(x, w1, b1, w2, b2, wo_p, bo_p)

    return out_padded[:, :d_out]


def _init_linear(key, fan_in, fan_out):
    # Deterministic PyTorch-style uniform(-1/sqrt(fan_in), 1/sqrt(fan_in)) init.
    kw, kb = jax.random.split(key)
    bound = 1.0 / jnp.sqrt(fan_in)
    # Stored directly as (in, out) - i.e. W^T relative to PyTorch's (out, in).
    w_t = jax.random.uniform(kw, (fan_in, fan_out), jnp.float32, -bound, bound)
    b = jax.random.uniform(kb, (1, fan_out), jnp.float32, -bound, bound)
    return w_t, b


def _ref_forward(x, w1, b1, w2, b2, wo, bo):
    # Pure-JAX reference using the same bf16 MXU inputs / f32 accumulation path.
    def mm(a, w):
        return jnp.dot(a.astype(jnp.bfloat16), w.astype(jnp.bfloat16),
                       preferred_element_type=jnp.float32)

    h = jnp.maximum(mm(x, w1) + b1, 0.0)
    h = jnp.maximum(mm(h, w2) + b2, 0.0)
    return mm(h, wo) + bo


if __name__ == "__main__":
    # Module config: input_dim=16, hidden_sizes=[32, 32], dropout=None, activation=ReLU
    batch, input_dim = 16, 16
    h1, h2, out_dim = 32, 32, 2

    key = jax.random.PRNGKey(0)
    kx, k1, k2, k3 = jax.random.split(key, 4)

    x = jax.random.normal(kx, (batch, input_dim), jnp.float32)
    w1, b1 = _init_linear(k1, input_dim, h1)
    w2, b2 = _init_linear(k2, h1, h2)
    wo, bo = _init_linear(k3, h2, out_dim)

    params = prepare_params(w1, b1, w2, b2, wo, bo)  # one-time prep (bf16, padded)

    out = quantnn_forward(x, params, batch_tile=1024)
    out = jax.block_until_ready(out)
    ref = _ref_forward(x, w1, b1, w2, b2, wo, bo)

    assert out.shape == (batch, out_dim)
    assert jnp.allclose(out, ref, atol=1e-4, rtol=1e-4), "mismatch vs reference"

    # Second check: batch not a multiple of 8 -> exercises the partial last block
    # path (no wrapper-side padding of x anymore).
    x2 = jax.random.normal(jax.random.PRNGKey(1), (13, input_dim), jnp.float32)
    out2 = jax.block_until_ready(quantnn_forward(x2, params, batch_tile=1024))
    ref2 = _ref_forward(x2, w1, b1, w2, b2, wo, bo)
    assert out2.shape == (13, out_dim)
    assert jnp.allclose(out2, ref2, atol=1e-4, rtol=1e-4), "mismatch (partial block)"

    print("KERNEL_OK")
</pallas_src>

<mosaic_0001>
module attributes {stable_mosaic.version = 11 : i64} {
  func.func @quantnn_kernel(%arg0: i32, %arg1: memref<16x16xf32, #tpu.memory_space<vmem>>, %arg2: memref<16x32xbf16, #tpu.memory_space<vmem>>, %arg3: memref<1x32xf32, #tpu.memory_space<vmem>>, %arg4: memref<32x32xbf16, #tpu.memory_space<vmem>>, %arg5: memref<1x32xf32, #tpu.memory_space<vmem>>, %arg6: memref<32x8xbf16, #tpu.memory_space<vmem>>, %arg7: memref<1x8xf32, #tpu.memory_space<vmem>>, %arg8: memref<16x8xf32, #tpu.memory_space<vmem>>) attributes {dimension_semantics = [#tpu.dimension_semantics<parallel>], iteration_bounds = array<i64: 1>, scalar_prefetch = 0 : i64, scratch_operands = 0 : i64, tpu.core_type = #tpu.core_type<tc>, window_params = [{transform_indices = @transform_0, window_bounds = array<i64: 16, 16>}, {pipeline_mode = #tpu.pipeline_mode<synchronous>, transform_indices = @transform_1, window_bounds = array<i64: 16, 32>}, {pipeline_mode = #tpu.pipeline_mode<synchronous>, transform_indices = @transform_2, window_bounds = array<i64: 1, 32>}, {pipeline_mode = #tpu.pipeline_mode<synchronous>, transform_indices = @transform_3, window_bounds = array<i64: 32, 32>}, {pipeline_mode = #tpu.pipeline_mode<synchronous>, transform_indices = @transform_4, window_bounds = array<i64: 1, 32>}, {pipeline_mode = #tpu.pipeline_mode<synchronous>, transform_indices = @transform_5, window_bounds = array<i64: 32, 8>}, {pipeline_mode = #tpu.pipeline_mode<synchronous>, transform_indices = @transform_6, window_bounds = array<i64: 1, 8>}, {transform_indices = @transform_7, window_bounds = array<i64: 16, 8>}]} {
    %c0 = arith.constant 0 : index
    %c0_0 = arith.constant 0 : index
    %0 = vector.load %arg1[%c0, %c0_0] : memref<16x16xf32, #tpu.memory_space<vmem>>, vector<16x16xf32>
    %1 = arith.truncf %0 : vector<16x16xf32> to vector<16x16xbf16>
    %c0_1 = arith.constant 0 : index
    %c0_2 = arith.constant 0 : index
    %2 = vector.load %arg2[%c0_1, %c0_2] : memref<16x32xbf16, #tpu.memory_space<vmem>>, vector<16x32xbf16>
    %cst = arith.constant dense<0.000000e+00> : vector<16x32xf32>
    %3 = tpu.matmul %1, %2, %cst {dimension_numbers = #tpu.dot_dimension_numbers<[1], [0], [0], [1], [0, 0, 1, 1], [], []>} : vector<16x16xbf16>, vector<16x32xbf16>, vector<16x32xf32> -> vector<16x32xf32>
    %c0_3 = arith.constant 0 : index
    %c0_4 = arith.constant 0 : index
    %4 = vector.load %arg3[%c0_3, %c0_4] : memref<1x32xf32, #tpu.memory_space<vmem>>, vector<1x32xf32>
    %5 = vector.broadcast %4 : vector<1x32xf32> to vector<16x32xf32>
    %6 = arith.addf %3, %5 : vector<16x32xf32>
    %cst_5 = arith.constant 0.000000e+00 : f32
    %7 = vector.broadcast %cst_5 : f32 to vector<16x32xf32>
    %8 = arith.maximumf %6, %7 : vector<16x32xf32>
    %9 = arith.truncf %8 : vector<16x32xf32> to vector<16x32xbf16>
    %c0_6 = arith.constant 0 : index
    %c0_7 = arith.constant 0 : index
    %10 = vector.load %arg4[%c0_6, %c0_7] : memref<32x32xbf16, #tpu.memory_space<vmem>>, vector<32x32xbf16>
    %cst_8 = arith.constant dense<0.000000e+00> : vector<16x32xf32>
    %11 = tpu.matmul %9, %10, %cst_8 {dimension_numbers = #tpu.dot_dimension_numbers<[1], [0], [0], [1], [0, 0, 1, 1], [], []>} : vector<16x32xbf16>, vector<32x32xbf16>, vector<16x32xf32> -> vector<16x32xf32>
    %c0_9 = arith.constant 0 : index
    %c0_10 = arith.constant 0 : index
    %12 = vector.load %arg5[%c0_9, %c0_10] : memref<1x32xf32, #tpu.memory_space<vmem>>, vector<1x32xf32>
    %13 = vector.broadcast %12 : vector<1x32xf32> to vector<16x32xf32>
    %14 = arith.addf %11, %13 : vector<16x32xf32>
    %cst_11 = arith.constant 0.000000e+00 : f32
    %15 = vector.broadcast %cst_11 : f32 to vector<16x32xf32>
    %16 = arith.maximumf %14, %15 : vector<16x32xf32>
    %17 = arith.truncf %16 : vector<16x32xf32> to vector<16x32xbf16>
    %c0_12 = arith.constant 0 : index
    %c0_13 = arith.constant 0 : index
    %18 = vector.load %arg6[%c0_12, %c0_13] : memref<32x8xbf16, #tpu.memory_space<vmem>>, vector<32x8xbf16>
    %cst_14 = arith.constant dense<0.000000e+00> : vector<16x8xf32>
    %19 = tpu.matmul %17, %18, %cst_14 {dimension_numbers = #tpu.dot_dimension_numbers<[1], [0], [0], [1], [0, 0, 1, 1], [], []>} : vector<16x32xbf16>, vector<32x8xbf16>, vector<16x8xf32> -> vector<16x8xf32>
    %c0_15 = arith.constant 0 : index
    %c0_16 = arith.constant 0 : index
    %20 = vector.load %arg7[%c0_15, %c0_16] : memref<1x8xf32, #tpu.memory_space<vmem>>, vector<1x8xf32>
    %21 = vector.broadcast %20 : vector<1x8xf32> to vector<16x8xf32>
    %22 = arith.addf %19, %21 : vector<16x8xf32>
    %c0_17 = arith.constant 0 : index
    %c0_18 = arith.constant 0 : index
    %23 = vector.load %arg8[%c0_17, %c0_18] : memref<16x8xf32, #tpu.memory_space<vmem>>, vector<16x8xf32>
    tpu.vector_store %arg8[%c0_17, %c0_18], %22 {strides = array<i32>} : memref<16x8xf32, #tpu.memory_space<vmem>>, vector<16x8xf32>,
    return
  }
  func.func @transform_0(%arg0: i32) -> (i32, i32) {
    %c0_i32 = arith.constant 0 : i32
    %c0_i32_0 = arith.constant 0 : i32
    return %arg0, %c0_i32 : i32, i32
  }
  func.func @transform_1(%arg0: i32) -> (i32, i32) {
    %c0_i32 = arith.constant 0 : i32
    %c0_i32_0 = arith.constant 0 : i32
    %c0_i32_1 = arith.constant 0 : i32
    return %c0_i32, %c0_i32_0 : i32, i32
  }
  func.func @transform_2(%arg0: i32) -> (i32, i32) {
    %c0_i32 = arith.constant 0 : i32
    %c0_i32_0 = arith.constant 0 : i32
    %c0_i32_1 = arith.constant 0 : i32
    return %c0_i32, %c0_i32_0 : i32, i32
  }
  func.func @transform_3(%arg0: i32) -> (i32, i32) {
    %c0_i32 = arith.constant 0 : i32
    %c0_i32_0 = arith.constant 0 : i32
    %c0_i32_1 = arith.constant 0 : i32
    return %c0_i32, %c0_i32_0 : i32, i32
  }
  func.func @transform_4(%arg0: i32) -> (i32, i32) {
    %c0_i32 = arith.constant 0 : i32
    %c0_i32_0 = arith.constant 0 : i32
    %c0_i32_1 = arith.constant 0 : i32
    return %c0_i32, %c0_i32_0 : i32, i32
  }
  func.func @transform_5(%arg0: i32) -> (i32, i32) {
    %c0_i32 = arith.constant 0 : i32
    %c0_i32_0 = arith.constant 0 : i32
    %c0_i32_1 = arith.constant 0 : i32
    return %c0_i32, %c0_i32_0 : i32, i32
  }
  func.func @transform_6(%arg0: i32) -> (i32, i32) {
    %c0_i32 = arith.constant 0 : i32
    %c0_i32_0 = arith.constant 0 : i32
    %c0_i32_1 = arith.constant 0 : i32
    return %c0_i32, %c0_i32_0 : i32, i32
  }
  func.func @transform_7(%arg0: i32) -> (i32, i32) {
    %c0_i32 = arith.constant 0 : i32
    %c0_i32_0 = arith.constant 0 : i32
    return %arg0, %c0_i32 : i32, i32
  }
}

</mosaic_0001>

<llo_original>
// kernel: tpu_custom_call.1
$region0: #{tpu_custom_call.1}
  #allocation0 [shape = 'u32[]', space=smem, size = 0x4, offset = 0x4, fixed_abs, tag = 'smem constant byte address 0x4 - core index']
  #allocation1 [shape = 'u32[144,128]{1,0:T(1,128)}', space=vmem, size = 0x12000, scoped, tag = 'internal scratch']
  %s0 = inlined_call_operand.vmem [shape: f32[16,16], index: 0, kind: input, shape index: {}]
  %s1 = inlined_call_operand.hbm [shape: bf16[16,32], index: 1, kind: input, shape index: {}]
  %s2 = inlined_call_operand.vmem [shape: f32[1,32], index: 2, kind: input, shape index: {}]
  %s3 = inlined_call_operand.hbm [shape: bf16[32,32], index: 3, kind: input, shape index: {}]
  %s4 = inlined_call_operand.vmem [shape: f32[1,32], index: 4, kind: input, shape index: {}]
  %s5 = inlined_call_operand.vmem [shape: bf16[32,8], index: 5, kind: input, shape index: {}]
  %s6 = inlined_call_operand.vmem [shape: f32[1,8], index: 6, kind: input, shape index: {}]
  %s7 = inlined_call_operand.vmem [shape: f32[16,8], index: 7, kind: output, shape index: {}]
  %s8 = sld [smem:[#allocation0]]
  $region46: #{tpu_custom_call.1} parent=0
    _
  %s10 = ssub.s32 1, %s8
  %s11 = scalar_select 0, %s10, %s8
  $region1: #{tpu_custom_call.1} parent=0
    #allocation2 [shape = 'u8[4096]{0}', space=vmem, size = 0x1000, scoped, tag = 'input window, operand 1, single buffered']
    #allocation3 [shape = 's32[1]{0}', space=sflag, size = 0x4, scoped, tag = 'scoped memory for tpu_custom_call.1']
    #allocation4 [shape = 'u8[8192]{0}', space=vmem, size = 0x2000, scoped, tag = 'input window, operand 3, single buffered']
    #allocation5 [shape = 's32[1]{0}', space=sflag, size = 0x4, scoped, tag = 'scoped memory for tpu_custom_call.1']
    %12 = vsyncpa [#allocation3], 0
    %13 = vsyncpa [#allocation5], 0
    // Predicated region
    $region2: #{tpu_custom_call.1} parent=1 // pred_check
      _
    $region3: #{tpu_custom_call.1} parent=1 // pred_check_branch
      %15 = sbr.rel (0) target = $region5
    $region4: #{tpu_custom_call.1} parent=1 // pred_region
      _
    $region5: #{tpu_custom_call.1} parent=1 // pred_fallthru
      _
    // Predicated region
    $region6: #{tpu_custom_call.1} parent=1 // pred_check
      _
    $region7: #{tpu_custom_call.1} parent=1 // pred_check_branch
      %17 = sbr.rel (0) target = $region9
    $region8: #{tpu_custom_call.1} parent=1 // pred_region
      %s19 = ssub.s32 128, 128
      %20 = vsyncadd [#allocation3], %s19
      %s21 = sshll.u32 [#allocation2], 4
      %s22 = int_to_ptr.vmem [resolvable:$true] %s21
      %27 = dma.hbm_to_vmem [thread:$0]  %s1, 128, %s22, [#allocation3], 64, 64, 4
    $region9: #{tpu_custom_call.1} parent=1 // pred_fallthru
      _
    // Predicated region
    $region10: #{tpu_custom_call.1} parent=1 // pred_check
      _
    $region11: #{tpu_custom_call.1} parent=1 // pred_check_branch
      %29 = sbr.rel (0) target = $region13
    $region12: #{tpu_custom_call.1} parent=1 // pred_region
      _
    $region13: #{tpu_custom_call.1} parent=1 // pred_fallthru
      _
    // Predicated region
    $region14: #{tpu_custom_call.1} parent=1 // pred_check
      _
    $region15: #{tpu_custom_call.1} parent=1 // pred_check_branch
      %31 = sbr.rel (0) target = $region17
    $region16: #{tpu_custom_call.1} parent=1 // pred_region
      %s33 = ssub.s32 256, 256
      %34 = vsyncadd [#allocation5], %s33
      %s35 = sshll.u32 [#allocation4], 4
      %s36 = int_to_ptr.vmem [resolvable:$true] %s35
      %41 = dma.hbm_to_vmem [thread:$0]  %s3, 256, %s36, [#allocation5], 64, 64, 4
    $region17: #{tpu_custom_call.1} parent=1 // pred_fallthru
      _
    // Predicated region
    $region18: #{tpu_custom_call.1} parent=1 // pred_check
      _
    $region19: #{tpu_custom_call.1} parent=1 // pred_check_branch
      %43 = sbr.rel (0) target = $region21
    $region20: #{tpu_custom_call.1} parent=1 // pred_region
      _
    $region21: #{tpu_custom_call.1} parent=1 // pred_fallthru
      _
    // Predicated region
    $region22: #{tpu_custom_call.1} parent=1 // pred_check
      _
    $region23: #{tpu_custom_call.1} parent=1 // pred_check_branch
      %45 = sbr.rel (0) target = $region25
    $region24: #{tpu_custom_call.1} parent=1 // pred_region
      _
    $region25: #{tpu_custom_call.1} parent=1 // pred_fallthru
      _
    // Predicated region
    $region26: #{tpu_custom_call.1} parent=1 // pred_check
      _
    $region27: #{tpu_custom_call.1} parent=1 // pred_check_branch
      %47 = sbr.rel (0) target = $region29
    $region28: #{tpu_custom_call.1} parent=1 // pred_region
      _
    $region29: #{tpu_custom_call.1} parent=1 // pred_fallthru
      _
    // Predicated region
    $region30: #{tpu_custom_call.1} parent=1 // pred_check
      _
    $region31: #{tpu_custom_call.1} parent=1 // pred_check_branch
      %49 = sbr.rel (0) target = $region33
    $region32: #{tpu_custom_call.1} parent=1 // pred_region
      %50 = dma.done [#allocation3], 128
    $region33: #{tpu_custom_call.1} parent=1 // pred_fallthru
      _
    // Predicated region
    $region34: #{tpu_custom_call.1} parent=1 // pred_check
      _
    $region35: #{tpu_custom_call.1} parent=1 // pred_check_branch
      %52 = sbr.rel (0) target = $region37
    $region36: #{tpu_custom_call.1} parent=1 // pred_region
      %53 = dma.done [#allocation5], 256
    $region37: #{tpu_custom_call.1} parent=1 // pred_fallthru
      _
    %v55 = vld [vmem:[%s0] sm:$0xff]
    %v56 = vld [vmem:[%s0 + $0x8] sm:$0xff]
    %v57 = vpack.c.bf16 %v56, %v55
    %v58 = vld [vmem:[#allocation2] sm:$0xf]
    %v59 = vld [vmem:[#allocation2 + $0x4] sm:$0xf]
    %v60 = vld [vmem:[%s2] sm:$0x1]
    %v62 = vlaneseq
    %v63 = vshrl.u32 %v62, 7
    %v64 = vsub.s32 0, %v63
    %v65 = vrot.slane %v60, %v64
    %v69 = vunpack.c.l.b16 %v58
    %v70 = vunpack.c.l.b16 %v59
    %v71 = vpack.c.b16 %v70, %v69
    %vm73 = vcmask 130048
    %v75 = vsel %vm73, %v57, 0
    %77 = vmatprep.subr.bf16.mxu0 0
    %78 = vmatpush1.bf16.msra.mxu0 %v71
    %79 = vmatprep.subr.bf16.mxu0 0
    %80 = vmatpush1.bf16.msra.mxu0 0
    %81 = vmatprep.subr.bf16.mxu0 0
    %82 = vmatpush1.bf16.msra.mxu0 0
    %83 = vmatprep.subr.bf16.mxu0 0
    %84 = vmatpush1.bf16.msra.mxu0 0
    %85 = vmatprep.subr.bf16.mxu0 0
    %86 = vmatpush1.bf16.msra.mxu0 0
    %87 = vmatprep.subr.bf16.mxu0 0
    %88 = vmatpush1.bf16.msra.mxu0 0
    %89 = vmatprep.subr.bf16.mxu0 0
    %90 = vmatpush1.bf16.msra.mxu0 0
    %91 = vmatprep.subr.bf16.mxu0 0
    %92 = vmatpush1.bf16.msra.mxu0 0
    %93 = vmatprep.subr.bf16.mxu0 0
    %94 = vmatpush1.bf16.msra.mxu0 0
    %95 = vmatprep.subr.bf16.mxu0 0
    %96 = vmatpush1.bf16.msra.mxu0 0
    %97 = vmatprep.subr.bf16.mxu0 0
    %98 = vmatpush1.bf16.msra.mxu0 0
    %99 = vmatprep.subr.bf16.mxu0 0
    %100 = vmatpush1.bf16.msra.mxu0 0
    %101 = vmatprep.subr.bf16.mxu0 0
    %102 = vmatpush1.bf16.msra.mxu0 0
    %103 = vmatprep.subr.bf16.mxu0 0
    %104 = vmatpush1.bf16.msra.mxu0 0
    %105 = vmatprep.subr.bf16.mxu0 0
    %106 = vmatpush1.bf16.msra.mxu0 0
    %107 = vmatprep.subr.bf16.mxu0 0
    %108 = vmatpush1.bf16.msra.mxu0 0
    %109 = vmatprep.mubr.bf16.mxu0 0
    %110 = vmatmul.mubr.bf16.gmra.mrb[0].mxu0 %v75
    %v111 = vpop.f32.mrb[0].mxu0
    %v112 = vadd.f32 %v65, %v111
    %v113 = vpop.f32.mrb[0].mxu0
    %v114 = vpop.f32.mrb[0].mxu0
    %v115 = vadd.f32 %v65, %v114
    %v116 = vpop.f32.mrb[0].mxu0
    %117 = vdwg.mxu0
    %v118 = vmax.f32 %v112, 0.0
    %v119 = vmax.f32 %v115, 0.0
    %v120 = vpack.c.bf16 %v119, %v118
    %v121 = vld [vmem:[#allocation4] sm:$0xf]
    %v122 = vld [vmem:[#allocation4 + $0x4] sm:$0xf]
    %v123 = vld [vmem:[#allocation4 + $0x8] sm:$0xf]
    %v124 = vld [vmem:[#allocation4 + $0xc] sm:$0xf]
    %v125 = vld [vmem:[%s4] sm:$0x1]
    %v127 = vlaneseq
    %v128 = vshrl.u32 %v127, 7
    %v129 = vsub.s32 0, %v128
    %v130 = vrot.slane %v125, %v129
    %v136 = vunpack.c.l.b16 %v121
    %v137 = vunpack.c.l.b16 %v122
    %v138 = vunpack.c.l.b16 %v123
    %v139 = vunpack.c.l.b16 %v124
    %v140 = vpack.c.b16 %v137, %v136
    %v141 = vpack.c.b16 %v139, %v138
    %vm144 = vcmask 261120
    %v146 = vsel %vm144, %v120, 0
    %148 = vmatprep.subr.bf16.mxu0 0
    %149 = vmatpush1.bf16.msra.mxu0 %v140
    %150 = vmatprep.subr.bf16.mxu0 0
    %151 = vmatpush1.bf16.msra.mxu0 %v141
    %152 = vmatprep.subr.bf16.mxu0 0
    %153 = vmatpush1.bf16.msra.mxu0 0
    %154 = vmatprep.subr.bf16.mxu0 0
    %155 = vmatpush1.bf16.msra.mxu0 0
    %156 = vmatprep.subr.bf16.mxu0 0
    %157 = vmatpush1.bf16.msra.mxu0 0
    %158 = vmatprep.subr.bf16.mxu0 0
    %159 = vmatpush1.bf16.msra.mxu0 0
    %160 = vmatprep.subr.bf16.mxu0 0
    %161 = vmatpush1.bf16.msra.mxu0 0
    %162 = vmatprep.subr.bf16.mxu0 0
    %163 = vmatpush1.bf16.msra.mxu0 0
    %164 = vmatprep.subr.bf16.mxu0 0
    %165 = vmatpush1.bf16.msra.mxu0 0
    %166 = vmatprep.subr.bf16.mxu0 0
    %167 = vmatpush1.bf16.msra.mxu0 0
    %168 = vmatprep.subr.bf16.mxu0 0
    %169 = vmatpush1.bf16.msra.mxu0 0
    %170 = vmatprep.subr.bf16.mxu0 0
    %171 = vmatpush1.bf16.msra.mxu0 0
    %172 = vmatprep.subr.bf16.mxu0 0
    %173 = vmatpush1.bf16.msra.mxu0 0
    %174 = vmatprep.subr.bf16.mxu0 0
    %175 = vmatpush1.bf16.msra.mxu0 0
    %176 = vmatprep.subr.bf16.mxu0 0
    %177 = vmatpush1.bf16.msra.mxu0 0
    %178 = vmatprep.subr.bf16.mxu0 0
    %179 = vmatpush1.bf16.msra.mxu0 0
    %180 = vmatprep.mubr.bf16.mxu0 0
    %181 = vmatmul.mubr.bf16.gmra.mrb[0].mxu0 %v146
    %v182 = vpop.f32.mrb[0].mxu0
    %v183 = vadd.f32 %v130, %v182
    %v184 = vpop.f32.mrb[0].mxu0
    %v185 = vpop.f32.mrb[0].mxu0
    %v186 = vadd.f32 %v130, %v185
    %v187 = vpop.f32.mrb[0].mxu0
    %188 = vdwg.mxu0
    %v189 = vmax.f32 %v183, 0.0
    %v190 = vmax.f32 %v186, 0.0
    %v191 = vpack.c.bf16 %v190, %v189
    %v192 = vld [vmem:[%s5] sm:$0xf]
    %v193 = vld [vmem:[%s5 + $0x4] sm:$0xf]
    %v194 = vld [vmem:[%s5 + $0x8] sm:$0xf]
    %v195 = vld [vmem:[%s5 + $0xc] sm:$0xf]
    %v196 = vld [vmem:[%s6] sm:$0x1]
    %v198 = vlaneseq
    %v199 = vshrl.u32 %v198, 7
    %v200 = vsub.s32 0, %v199
    %v201 = vrot.slane %v196, %v200
    %v207 = vunpack.c.l.b16 %v192
    %v208 = vunpack.c.l.b16 %v193
    %v209 = vunpack.c.l.b16 %v194
    %v210 = vunpack.c.l.b16 %v195
    %v211 = vpack.c.b16 %v208, %v207
    %v212 = vpack.c.b16 %v210, %v209
    %v216 = vsel %vm144, %v191, 0
    %218 = vmatprep.subr.bf16.mxu0 0
    %219 = vmatpush1.bf16.msra.mxu0 %v211
    %220 = vmatprep.subr.bf16.mxu0 0
    %221 = vmatpush1.bf16.msra.mxu0 %v212
    %222 = vmatprep.subr.bf16.mxu0 0
    %223 = vmatpush1.bf16.msra.mxu0 0
    %224 = vmatprep.subr.bf16.mxu0 0
    %225 = vmatpush1.bf16.msra.mxu0 0
    %226 = vmatprep.subr.bf16.mxu0 0
    %227 = vmatpush1.bf16.msra.mxu0 0
    %228 = vmatprep.subr.bf16.mxu0 0
    %229 = vmatpush1.bf16.msra.mxu0 0
    %230 = vmatprep.subr.bf16.mxu0 0
    %231 = vmatpush1.bf16.msra.mxu0 0
    %232 = vmatprep.subr.bf16.mxu0 0
    %233 = vmatpush1.bf16.msra.mxu0 0
    %234 = vmatprep.subr.bf16.mxu0 0
    %235 = vmatpush1.bf16.msra.mxu0 0
    %236 = vmatprep.subr.bf16.mxu0 0
    %237 = vmatpush1.bf16.msra.mxu0 0
    %238 = vmatprep.subr.bf16.mxu0 0
    %239 = vmatpush1.bf16.msra.mxu0 0
    %240 = vmatprep.subr.bf16.mxu0 0
    %241 = vmatpush1.bf16.msra.mxu0 0
    %242 = vmatprep.subr.bf16.mxu0 0
    %243 = vmatpush1.bf16.msra.mxu0 0
    %244 = vmatprep.subr.bf16.mxu0 0
    %245 = vmatpush1.bf16.msra.mxu0 0
    %246 = vmatprep.subr.bf16.mxu0 0
    %247 = vmatpush1.bf16.msra.mxu0 0
    %248 = vmatprep.subr.bf16.mxu0 0
    %249 = vmatpush1.bf16.msra.mxu0 0
    %250 = vmatprep.mubr.bf16.mxu0 0
    %251 = vmatmul.mubr.bf16.gmra.mrb[0].mxu0 %v216
    %v252 = vpop.f32.mrb[0].mxu0
    %v253 = vadd.f32 %v201, %v252
    %v254 = vpop.f32.mrb[0].mxu0
    %v255 = vpop.f32.mrb[0].mxu0
    %v256 = vadd.f32 %v201, %v255
    %v257 = vpop.f32.mrb[0].mxu0
    %258 = vdwg.mxu0
    %vm259 = vcmask 64512
    %260 = vst.msk [vmem:[%s7] sm:$0xff] %vm259, %v253
    %261 = vst.msk [vmem:[%s7 + $0x8] sm:$0xff] %vm259, %v256
    // Predicated region
    $region38: #{tpu_custom_call.1} parent=1 // pred_check
      _
    $region39: #{tpu_custom_call.1} parent=1 // pred_check_branch
      %263 = sbr.rel (0) target = $region41
    $region40: #{tpu_custom_call.1} parent=1 // pred_region
      _
    $region41: #{tpu_custom_call.1} parent=1 // pred_fallthru
      _
    // Predicated region
    $region42: #{tpu_custom_call.1} parent=1 // pred_check
      _
    $region43: #{tpu_custom_call.1} parent=1 // pred_check_branch
      %265 = sbr.rel (0) target = $region45
    $region44: #{tpu_custom_call.1} parent=1 // pred_region
      _
    $region45: #{tpu_custom_call.1} parent=1 // pred_fallthru
      _
    %266 = vsyncpa [#allocation3], 1
    %267 = vsyncpa [#allocation5], 1

</llo_original>
